<compile_context>
chip_gen: v5e
topology: v5e:2x2
jax: 0.10.0
libtpu: 0.0.40
codegen_flags: <defaults>
</compile_context>

<pallas_src>
import functools

import jax
import jax.numpy as jnp
from jax.experimental import pallas as pl
from jax.experimental.pallas import tpu as pltpu


NEG_SLOPE = 0.01  # PyTorch LeakyReLU default
LANE = 128


def _relu(x):
    return jnp.maximum(x, 0.0)


def _lrelu(x):
    return jnp.where(x > 0, x, NEG_SLOPE * x)


def _round_up(x, m):
    return ((x + m - 1) // m) * m


# ----------------------------- Pallas kernels ------------------------------

def node_ffn_kernel(h_ref, Wn1, bn1, Wn2, bn2, out_ref, *, compute_dtype):
    """Fused FeedForward n1 & n2 over a tile of node rows (lane-padded).

    Wn1 = [A1 | B1 | 0]              (F,  Ph)  : t   = relu(h @ Wn1 + bn1)
    Wn2 = blockdiag(A2, B2) + 0 pad  (Ph, Pn)  : out = relu(t @ Wn2 + bn2) = [n1(h)|n2(h)|0]
    Eval-mode BatchNorm is folded into the Linear weights/biases.
    """
    h = h_ref[...]
    t = _relu(jnp.dot(h, Wn1[...], preferred_element_type=jnp.float32) + bn1[...])
    o = _relu(jnp.dot(t.astype(compute_dtype), Wn2[...],
                      preferred_element_type=jnp.float32) + bn2[...])
    out_ref[...] = o.astype(out_ref.dtype)


def edge_mlp_kernel(hu_ref, hv_ref, e_ref,
                    Wsrc, Wdst, We, c1, W2, c2, W3, c3, out_ref, *, compute_dtype):
    """Per-edge MLP head, concat-free:

    z1 = LReLU(hu @ W1_src + hv @ W1_dst + e @ W1_e + c1)   (== LReLU(BN1(W1(cat))))
    z2 = LReLU(z1 @ W2 + c2);  score = LReLU(z2 @ W3 + c3)  (BN folded, eval mode)
    W1_src / W1_dst are zero-masked so each only reads its own FFN half of the
    lane-padded node-feature rows.
    """
    z = (jnp.dot(hu_ref[...], Wsrc[...], preferred_element_type=jnp.float32)
         + jnp.dot(hv_ref[...], Wdst[...], preferred_element_type=jnp.float32)
         + jnp.dot(e_ref[...], We[...], preferred_element_type=jnp.float32)
         + c1[...])
    z = _lrelu(z)
    z = _lrelu(jnp.dot(z.astype(compute_dtype), W2[...],
                       preferred_element_type=jnp.float32) + c2[...])
    z = _lrelu(jnp.dot(z.astype(compute_dtype), W3[...],
                       preferred_element_type=jnp.float32) + c3[...])
    out_ref[...] = z.astype(out_ref.dtype)


# ------------------------------ pallas_call glue ----------------------------

# One-time capability cache: can constant-index weight specs be single-buffered
# (pipeline_mode=pl.Buffered(1)) on this jax/libtpu build?  None = untested.
_SINGLE_BUFFER_WEIGHTS = None


def _vmem_limit_bytes(row_inputs, weight_args, tile, out_dim, out_dtype):
    """Explicit scoped-VMEM budget with headroom (v5e default is only 16 MiB)."""
    est = 0
    for x in row_inputs:                       # double-buffered row tiles
        est += 2 * tile * x.shape[1] * x.dtype.itemsize
    est += 2 * tile * out_dim * jnp.dtype(out_dtype).itemsize
    for w in weight_args:                      # worst case: double-buffered weights
        est += 2 * w.size * w.dtype.itemsize
    est = int(1.5 * est) + (2 << 20)
    # clamp: >= the largest scoped default (32 MiB), <= 48 MiB (headroom under v7x's
    # 64 MiB physical VMEM for compiler-internal scratch).
    return max(32 << 20, min(est, 48 << 20))


def _row_tiled_call(kernel, row_inputs, weight_args, *, out_dim, out_dtype, row_tile):
    """Run `kernel` over row tiles of the row_inputs with all weights resident.

    grid = cdiv(R, tile); the boundary block is partially valid (no full-array pad) —
    safe because all ops are row-independent and Pallas masks the partial writeback.
    """
    global _SINGLE_BUFFER_WEIGHTS

    R = row_inputs[0].shape[0]
    row_tile = max(8, (row_tile // 8) * 8)
    tile = R if R <= row_tile else row_tile        # full-dim block is always legal
    grid = (pl.cdiv(R, tile),)

    row_specs = [pl.BlockSpec((tile, x.shape[1]), lambda i: (i, 0)) for x in row_inputs]
    out_spec = pl.BlockSpec((tile, out_dim), lambda i: (i, 0))
    out_shape = jax.ShapeDtypeStruct((R, out_dim), out_dtype)
    compiler_params = pltpu.CompilerParams(
        # On v7x, flip to pltpu.CORE_PARALLEL if the head is compute-bound at
        # production F/H; at these dims the stages are HBM/overhead-bound.
        dimension_semantics=("parallel",),
        vmem_limit_bytes=_vmem_limit_bytes(row_inputs, weight_args, tile,
                                           out_dim, out_dtype),
    )

    def call(single_buffer_weights):
        w_specs = []
        for w in weight_args:
            if single_buffer_weights:
                w_specs.append(pl.BlockSpec(w.shape, lambda i: (0, 0),
                                            pipeline_mode=pl.Buffered(1)))
            else:
                w_specs.append(pl.BlockSpec(w.shape, lambda i: (0, 0)))
        fn = pl.pallas_call(
            kernel,
            out_shape=out_shape,
            grid=grid,
            in_specs=row_specs + w_specs,
            out_specs=out_spec,
            compiler_params=compiler_params,
        )
        return jax.block_until_ready(fn(*row_inputs, *weight_args))

    if _SINGLE_BUFFER_WEIGHTS is None:
        try:
            out = call(True)
            _SINGLE_BUFFER_WEIGHTS = True
            return out
        except Exception:
            # Buffered(1) not supported by this build: fall back to default buffering.
            _SINGLE_BUFFER_WEIGHTS = False
    return call(_SINGLE_BUFFER_WEIGHTS)


def nk_mlp_predictor(h, edge_feat, src, dst, params, out_classes, *,
                     edge_tile=2048, node_tile=1024, compute_dtype=jnp.bfloat16):
    """h: [N, F] node features; edge_feat: [E, Fe]; src/dst: [E] int32 edge endpoints."""
    cd = compute_dtype

    # Stage 1: per-node fused FeedForward n1/n2 (computed once per node, not per edge),
    # lane-dense [N, Pn] output with n1 at cols [0:F] and n2 at cols [F:2F].
    node_kernel = functools.partial(node_ffn_kernel, compute_dtype=cd)
    P_n = params['Wn2'].shape[1]
    node_ff = _row_tiled_call(
        node_kernel, (h.astype(cd),),
        (params['Wn1'], params['bn1'], params['Wn2'], params['bn2']),
        out_dim=P_n, out_dtype=cd, row_tile=node_tile)

    # Glue: endpoint gather of the full lane-padded rows (W1_src / W1_dst are zero-masked
    # so each matmul only sees its FFN half). No concat is materialized.
    hu = jnp.take(node_ff, src, axis=0)
    hv = jnp.take(node_ff, dst, axis=0)
    # TODO(synk): move this gather in-kernel (VMEM-resident node_ff) once dynamic-gather
    # lowering is validated on all target generations.

    # Stage 2: per-edge W1/W2/W3 head, lane-dense [E, Pc] output.
    edge_kernel = functools.partial(edge_mlp_kernel, compute_dtype=cd)
    P_c = params['W3'].shape[1]
    score = _row_tiled_call(
        edge_kernel, (hu, hv, edge_feat.astype(cd)),
        (params['W1_src'], params['W1_dst'], params['W1_e'], params['c1'],
         params['W2'], params['c2'], params['W3'], params['c3']),
        out_dim=P_c, out_dtype=jnp.float32, row_tile=edge_tile)
    return score[:, :out_classes]


# --------------------------- parameter preparation --------------------------

def fold_linear_bn(W, b, gamma, beta, mean, var, eps=1e-5):
    """Fold eval-mode BatchNorm1d into the preceding Linear. W: (in, out)."""
    s = gamma / jnp.sqrt(var + eps)
    return W * s[None, :], b * s + (beta - mean * s)


def make_params(key, in_features, edges_feature, hidden_feature, out_classes,
                compute_dtype=jnp.bfloat16):
    ks = iter(jax.random.split(key, 64))

    def lin(din, dout):
        w = jax.random.normal(next(ks), (din, dout), jnp.float32) * 0.1
        b = jax.random.normal(next(ks), (dout,), jnp.float32) * 0.05
        return w, b

    def bn(d):
        gamma = 0.5 + jax.random.uniform(next(ks), (d,), jnp.float32)
        beta = jax.random.normal(next(ks), (d,), jnp.float32) * 0.05
        mean = jax.random.normal(next(ks), (d,), jnp.float32) * 0.1
        var = 0.5 + jax.random.uniform(next(ks), (d,), jnp.float32)
        return gamma, beta, mean, var

    F, Fe, H, C = in_features, edges_feature, hidden_feature, out_classes
    P_h = _round_up(4 * F, LANE)   # fused FFN hidden (n1||n2) lanes
    P_n = _round_up(2 * F, LANE)   # fused FFN output lanes
    P_1 = _round_up(2 * H, LANE)
    P_2 = _round_up(H, LANE)
    P_c = _round_up(C, LANE)

    # FeedForward n1 / n2 (Linear+BN folded, 2 layers each), fused + lane-padded.
    A1, a1 = fold_linear_bn(*lin(F, 2 * F), *bn(2 * F))
    A2, a2 = fold_linear_bn(*lin(2 * F, F), *bn(F))
    B1, b1 = fold_linear_bn(*lin(F, 2 * F), *bn(2 * F))
    B2, b2 = fold_linear_bn(*lin(2 * F, F), *bn(F))

    Wn1 = (jnp.zeros((F, P_h), jnp.float32)
           .at[:, :2 * F].set(A1).at[:, 2 * F:4 * F].set(B1))
    bn1_ = (jnp.zeros((1, P_h), jnp.float32)
            .at[0, :2 * F].set(a1).at[0, 2 * F:4 * F].set(b1))
    # Block-diagonal second layer; for 4F >= 256 split this into two half-size dots.
    Wn2 = (jnp.zeros((P_h, P_n), jnp.float32)
           .at[:2 * F, :F].set(A2).at[2 * F:4 * F, F:2 * F].set(B2))
    bn2_ = jnp.zeros((1, P_n), jnp.float32).at[0, :F].set(a2).at[0, F:2 * F].set(b2)

    # Edge head: W1 split into src/dst/edge-feature parts (concat-free), BN folded,
    # all out/in hidden dims lane-padded to 128 multiples.
    W1, c1 = fold_linear_bn(*lin(2 * F + Fe, 2 * H), *bn(2 * H))
    W2, c2 = fold_linear_bn(*lin(2 * H, H), *bn(H))
    W3, c3 = fold_linear_bn(*lin(H, C), *bn(C))

    W1_src = jnp.zeros((P_n, P_1), jnp.float32).at[:F, :2 * H].set(W1[:F])
    W1_dst = jnp.zeros((P_n, P_1), jnp.float32).at[F:2 * F, :2 * H].set(W1[F:2 * F])
    W1_e = jnp.zeros((Fe, P_1), jnp.float32).at[:, :2 * H].set(W1[2 * F:])
    c1_ = jnp.zeros((1, P_1), jnp.float32).at[0, :2 * H].set(c1)
    W2_ = jnp.zeros((P_1, P_2), jnp.float32).at[:2 * H, :H].set(W2)
    c2_ = jnp.zeros((1, P_2), jnp.float32).at[0, :H].set(c2)
    W3_ = jnp.zeros((P_2, P_c), jnp.float32).at[:H, :C].set(W3)
    c3_ = jnp.zeros((1, P_c), jnp.float32).at[0, :C].set(c3)

    cd = compute_dtype
    return {
        'Wn1': Wn1.astype(cd), 'bn1': bn1_, 'Wn2': Wn2.astype(cd), 'bn2': bn2_,
        'W1_src': W1_src.astype(cd), 'W1_dst': W1_dst.astype(cd),
        'W1_e': W1_e.astype(cd), 'c1': c1_,
        'W2': W2_.astype(cd), 'c2': c2_,
        'W3': W3_.astype(cd), 'c3': c3_,
    }


# --------------------------------- reference ---------------------------------

def reference(h, edge_feat, src, dst, p, out_classes):
    """Pure-JAX reference mirroring the kernel's bf16 quantization points."""
    cd = p['Wn1'].dtype
    f32 = lambda a: a.astype(jnp.float32)

    t = _relu(f32(h.astype(cd)) @ f32(p['Wn1']) + p['bn1'])
    nf = _relu(f32(t.astype(cd)) @ f32(p['Wn2']) + p['bn2']).astype(cd)
    hu, hv, e = nf[src], nf[dst], edge_feat.astype(cd)
    z = _lrelu(f32(hu) @ f32(p['W1_src']) + f32(hv) @ f32(p['W1_dst'])
               + f32(e) @ f32(p['W1_e']) + p['c1'])
    z = _lrelu(f32(z.astype(cd)) @ f32(p['W2']) + p['c2'])
    z = _lrelu(f32(z.astype(cd)) @ f32(p['W3']) + p['c3'])
    return z[:, :out_classes]


if __name__ == "__main__":
    key = jax.random.PRNGKey(0)
    k_h, k_e, k_s, k_d, k_p = jax.random.split(key, 5)

    in_features, edges_feature, hidden_feature, out_classes = 16, 8, 32, 4
    num_nodes, num_edges = 12, 16

    h = jax.random.normal(k_h, (num_nodes, in_features), jnp.float32)
    edge_feat = jax.random.normal(k_e, (num_edges, edges_feature), jnp.float32)
    src = jax.random.randint(k_s, (num_edges,), 0, num_nodes, jnp.int32)
    dst = jax.random.randint(k_d, (num_edges,), 0, num_nodes, jnp.int32)

    params = make_params(k_p, in_features, edges_feature, hidden_feature, out_classes)

    score = nk_mlp_predictor(h, edge_feat, src, dst, params, out_classes)
    score = jax.block_until_ready(score)

    ref = reference(h, edge_feat, src, dst, params, out_classes)
    assert score.shape == (num_edges, out_classes)
    assert jnp.allclose(score, ref, rtol=1e-3, atol=1e-3), "mismatch vs JAX reference"

    print("KERNEL_OK")
</pallas_src>

<mosaic_0001>
module attributes {stable_mosaic.version = 11 : i64} {
  func.func @node_ffn_kernel(%arg0: i32, %arg1: memref<12x16xbf16, #tpu.memory_space<vmem>>, %arg2: memref<16x128xbf16, #tpu.memory_space<vmem>>, %arg3: memref<1x128xf32, #tpu.memory_space<vmem>>, %arg4: memref<128x128xbf16, #tpu.memory_space<vmem>>, %arg5: memref<1x128xf32, #tpu.memory_space<vmem>>, %arg6: memref<12x128xbf16, #tpu.memory_space<vmem>>) attributes {dimension_semantics = [#tpu.dimension_semantics<parallel>], iteration_bounds = array<i64: 1>, scalar_prefetch = 0 : i64, scratch_operands = 0 : i64, tpu.core_type = #tpu.core_type<tc>, window_params = [{transform_indices = @transform_0, window_bounds = array<i64: 12, 16>}, {pipeline_mode = #tpu.pipeline_mode<synchronous>, transform_indices = @transform_1, window_bounds = array<i64: 16, 128>}, {pipeline_mode = #tpu.pipeline_mode<synchronous>, transform_indices = @transform_2, window_bounds = array<i64: 1, 128>}, {pipeline_mode = #tpu.pipeline_mode<synchronous>, transform_indices = @transform_3, window_bounds = array<i64: 128, 128>}, {pipeline_mode = #tpu.pipeline_mode<synchronous>, transform_indices = @transform_4, window_bounds = array<i64: 1, 128>}, {transform_indices = @transform_5, window_bounds = array<i64: 12, 128>}]} {
    %c0 = arith.constant 0 : index
    %c0_0 = arith.constant 0 : index
    %0 = vector.load %arg1[%c0, %c0_0] : memref<12x16xbf16, #tpu.memory_space<vmem>>, vector<12x16xbf16>
    %c0_1 = arith.constant 0 : index
    %c0_2 = arith.constant 0 : index
    %1 = vector.load %arg2[%c0_1, %c0_2] : memref<16x128xbf16, #tpu.memory_space<vmem>>, vector<16x128xbf16>
    %cst = arith.constant dense<0.000000e+00> : vector<12x128xf32>
    %2 = tpu.matmul %0, %1, %cst {dimension_numbers = #tpu.dot_dimension_numbers<[1], [0], [0], [1], [0, 0, 1, 1], [], []>} : vector<12x16xbf16>, vector<16x128xbf16>, vector<12x128xf32> -> vector<12x128xf32>
    %c0_3 = arith.constant 0 : index
    %c0_4 = arith.constant 0 : index
    %3 = vector.load %arg3[%c0_3, %c0_4] : memref<1x128xf32, #tpu.memory_space<vmem>>, vector<1x128xf32>
    %4 = vector.broadcast %3 : vector<1x128xf32> to vector<12x128xf32>
    %5 = arith.addf %2, %4 : vector<12x128xf32>
    %cst_5 = arith.constant 0.000000e+00 : f32
    %6 = vector.broadcast %cst_5 : f32 to vector<12x128xf32>
    %7 = arith.maximumf %5, %6 : vector<12x128xf32>
    %8 = arith.truncf %7 : vector<12x128xf32> to vector<12x128xbf16>
    %c0_6 = arith.constant 0 : index
    %c0_7 = arith.constant 0 : index
    %9 = vector.load %arg4[%c0_6, %c0_7] : memref<128x128xbf16, #tpu.memory_space<vmem>>, vector<128x128xbf16>
    %cst_8 = arith.constant dense<0.000000e+00> : vector<12x128xf32>
    %10 = tpu.matmul %8, %9, %cst_8 {dimension_numbers = #tpu.dot_dimension_numbers<[1], [0], [0], [1], [0, 0, 1, 1], [], []>} : vector<12x128xbf16>, vector<128x128xbf16>, vector<12x128xf32> -> vector<12x128xf32>
    %c0_9 = arith.constant 0 : index
    %c0_10 = arith.constant 0 : index
    %11 = vector.load %arg5[%c0_9, %c0_10] : memref<1x128xf32, #tpu.memory_space<vmem>>, vector<1x128xf32>
    %12 = vector.broadcast %11 : vector<1x128xf32> to vector<12x128xf32>
    %13 = arith.addf %10, %12 : vector<12x128xf32>
    %cst_11 = arith.constant 0.000000e+00 : f32
    %14 = vector.broadcast %cst_11 : f32 to vector<12x128xf32>
    %15 = arith.maximumf %13, %14 : vector<12x128xf32>
    %16 = arith.truncf %15 : vector<12x128xf32> to vector<12x128xbf16>
    %c0_12 = arith.constant 0 : index
    %c0_13 = arith.constant 0 : index
    %17 = vector.load %arg6[%c0_12, %c0_13] : memref<12x128xbf16, #tpu.memory_space<vmem>>, vector<12x128xbf16>
    tpu.vector_store %arg6[%c0_12, %c0_13], %16 {strides = array<i32>} : memref<12x128xbf16, #tpu.memory_space<vmem>>, vector<12x128xbf16>,
    return
  }
  func.func @transform_0(%arg0: i32) -> (i32, i32) {
    %c0_i32 = arith.constant 0 : i32
    %c0_i32_0 = arith.constant 0 : i32
    return %arg0, %c0_i32 : i32, i32
  }
  func.func @transform_1(%arg0: i32) -> (i32, i32) {
    %c0_i32 = arith.constant 0 : i32
    %c0_i32_0 = arith.constant 0 : i32
    %c0_i32_1 = arith.constant 0 : i32
    return %c0_i32, %c0_i32_0 : i32, i32
  }
  func.func @transform_2(%arg0: i32) -> (i32, i32) {
    %c0_i32 = arith.constant 0 : i32
    %c0_i32_0 = arith.constant 0 : i32
    %c0_i32_1 = arith.constant 0 : i32
    return %c0_i32, %c0_i32_0 : i32, i32
  }
  func.func @transform_3(%arg0: i32) -> (i32, i32) {
    %c0_i32 = arith.constant 0 : i32
    %c0_i32_0 = arith.constant 0 : i32
    %c0_i32_1 = arith.constant 0 : i32
    return %c0_i32, %c0_i32_0 : i32, i32
  }
  func.func @transform_4(%arg0: i32) -> (i32, i32) {
    %c0_i32 = arith.constant 0 : i32
    %c0_i32_0 = arith.constant 0 : i32
    %c0_i32_1 = arith.constant 0 : i32
    return %c0_i32, %c0_i32_0 : i32, i32
  }
  func.func @transform_5(%arg0: i32) -> (i32, i32) {
    %c0_i32 = arith.constant 0 : i32
    %c0_i32_0 = arith.constant 0 : i32
    return %arg0, %c0_i32 : i32, i32
  }
}

module attributes {stable_mosaic.version = 11 : i64} {
  func.func @node_ffn_kernel(%arg0: i32, %arg1: memref<12x16xbf16, #tpu.memory_space<vmem>>, %arg2: memref<16x128xbf16, #tpu.memory_space<vmem>>, %arg3: memref<1x128xf32, #tpu.memory_space<vmem>>, %arg4: memref<128x128xbf16, #tpu.memory_space<vmem>>, %arg5: memref<1x128xf32, #tpu.memory_space<vmem>>, %arg6: memref<12x128xbf16, #tpu.memory_space<vmem>>) attributes {dimension_semantics = [#tpu.dimension_semantics<parallel>], iteration_bounds = array<i64: 1>, scalar_prefetch = 0 : i64, scratch_operands = 0 : i64, tpu.core_type = #tpu.core_type<tc>, window_params = [{transform_indices = @transform_0, window_bounds = array<i64: 12, 16>}, {pipeline_mode = #tpu.pipeline_mode<synchronous>, transform_indices = @transform_1, window_bounds = array<i64: 16, 128>}, {pipeline_mode = #tpu.pipeline_mode<synchronous>, transform_indices = @transform_2, window_bounds = array<i64: 1, 128>}, {pipeline_mode = #tpu.pipeline_mode<synchronous>, transform_indices = @transform_3, window_bounds = array<i64: 128, 128>}, {pipeline_mode = #tpu.pipeline_mode<synchronous>, transform_indices = @transform_4, window_bounds = array<i64: 1, 128>}, {transform_indices = @transform_5, window_bounds = array<i64: 12, 128>}]} {
    %c0 = arith.constant 0 : index
    %c0_0 = arith.constant 0 : index
    %0 = vector.load %arg1[%c0, %c0_0] : memref<12x16xbf16, #tpu.memory_space<vmem>>, vector<12x16xbf16>
    %c0_1 = arith.constant 0 : index
    %c0_2 = arith.constant 0 : index
    %1 = vector.load %arg2[%c0_1, %c0_2] : memref<16x128xbf16, #tpu.memory_space<vmem>>, vector<16x128xbf16>
    %cst = arith.constant dense<0.000000e+00> : vector<12x128xf32>
    %2 = tpu.matmul %0, %1, %cst {dimension_numbers = #tpu.dot_dimension_numbers<[1], [0], [0], [1], [0, 0, 1, 1], [], []>} : vector<12x16xbf16>, vector<16x128xbf16>, vector<12x128xf32> -> vector<12x128xf32>
    %c0_3 = arith.constant 0 : index
    %c0_4 = arith.constant 0 : index
    %3 = vector.load %arg3[%c0_3, %c0_4] : memref<1x128xf32, #tpu.memory_space<vmem>>, vector<1x128xf32>
    %4 = vector.broadcast %3 : vector<1x128xf32> to vector<12x128xf32>
    %5 = arith.addf %2, %4 : vector<12x128xf32>
    %cst_5 = arith.constant 0.000000e+00 : f32
    %6 = vector.broadcast %cst_5 : f32 to vector<12x128xf32>
    %7 = arith.maximumf %5, %6 : vector<12x128xf32>
    %8 = arith.truncf %7 : vector<12x128xf32> to vector<12x128xbf16>
    %c0_6 = arith.constant 0 : index
    %c0_7 = arith.constant 0 : index
    %9 = vector.load %arg4[%c0_6, %c0_7] : memref<128x128xbf16, #tpu.memory_space<vmem>>, vector<128x128xbf16>
    %cst_8 = arith.constant dense<0.000000e+00> : vector<12x128xf32>
    %10 = tpu.matmul %8, %9, %cst_8 {dimension_numbers = #tpu.dot_dimension_numbers<[1], [0], [0], [1], [0, 0, 1, 1], [], []>} : vector<12x128xbf16>, vector<128x128xbf16>, vector<12x128xf32> -> vector<12x128xf32>
    %c0_9 = arith.constant 0 : index
    %c0_10 = arith.constant 0 : index
    %11 = vector.load %arg5[%c0_9, %c0_10] : memref<1x128xf32, #tpu.memory_space<vmem>>, vector<1x128xf32>
    %12 = vector.broadcast %11 : vector<1x128xf32> to vector<12x128xf32>
    %13 = arith.addf %10, %12 : vector<12x128xf32>
    %cst_11 = arith.constant 0.000000e+00 : f32
    %14 = vector.broadcast %cst_11 : f32 to vector<12x128xf32>
    %15 = arith.maximumf %13, %14 : vector<12x128xf32>
    %16 = arith.truncf %15 : vector<12x128xf32> to vector<12x128xbf16>
    %c0_12 = arith.constant 0 : index
    %c0_13 = arith.constant 0 : index
    %17 = vector.load %arg6[%c0_12, %c0_13] : memref<12x128xbf16, #tpu.memory_space<vmem>>, vector<12x128xbf16>
    tpu.vector_store %arg6[%c0_12, %c0_13], %16 {strides = array<i32>} : memref<12x128xbf16, #tpu.memory_space<vmem>>, vector<12x128xbf16>,
    return
  }
  func.func @transform_0(%arg0: i32) -> (i32, i32) {
    %c0_i32 = arith.constant 0 : i32
    %c0_i32_0 = arith.constant 0 : i32
    return %arg0, %c0_i32 : i32, i32
  }
  func.func @transform_1(%arg0: i32) -> (i32, i32) {
    %c0_i32 = arith.constant 0 : i32
    %c0_i32_0 = arith.constant 0 : i32
    %c0_i32_1 = arith.constant 0 : i32
    return %c0_i32, %c0_i32_0 : i32, i32
  }
  func.func @transform_2(%arg0: i32) -> (i32, i32) {
    %c0_i32 = arith.constant 0 : i32
    %c0_i32_0 = arith.constant 0 : i32
    %c0_i32_1 = arith.constant 0 : i32
    return %c0_i32, %c0_i32_0 : i32, i32
  }
  func.func @transform_3(%arg0: i32) -> (i32, i32) {
    %c0_i32 = arith.constant 0 : i32
    %c0_i32_0 = arith.constant 0 : i32
    %c0_i32_1 = arith.constant 0 : i32
    return %c0_i32, %c0_i32_0 : i32, i32
  }
  func.func @transform_4(%arg0: i32) -> (i32, i32) {
    %c0_i32 = arith.constant 0 : i32
    %c0_i32_0 = arith.constant 0 : i32
    %c0_i32_1 = arith.constant 0 : i32
    return %c0_i32, %c0_i32_0 : i32, i32
  }
  func.func @transform_5(%arg0: i32) -> (i32, i32) {
    %c0_i32 = arith.constant 0 : i32
    %c0_i32_0 = arith.constant 0 : i32
    return %arg0, %c0_i32 : i32, i32
  }
}

</mosaic_0001>

<llo_original>
// kernel: tpu_custom_call.1
$region0: #{tpu_custom_call.1}
  #allocation0 [shape = 'u32[]', space=smem, size = 0x4, offset = 0x4, fixed_abs, tag = 'smem constant byte address 0x4 - core index']
  #allocation1 [shape = 'u32[72,128]{1,0:T(1,128)}', space=vmem, size = 0x9000, scoped, tag = 'internal scratch']
  %s0 = inlined_call_operand.hbm [shape: bf16[12,16], index: 0, kind: input, shape index: {}]
  %s1 = inlined_call_operand.hbm [shape: bf16[16,128], index: 1, kind: input, shape index: {}]
  %s2 = inlined_call_operand.vmem [shape: f32[1,128], index: 2, kind: input, shape index: {}]
  %s3 = inlined_call_operand.hbm [shape: bf16[128,128], index: 3, kind: input, shape index: {}]
  %s4 = inlined_call_operand.vmem [shape: f32[1,128], index: 4, kind: input, shape index: {}]
  %s5 = inlined_call_operand.hbm [shape: bf16[12,128], index: 5, kind: output, shape index: {}]
  %s6 = sld [smem:[#allocation0]]
  $region42: #{tpu_custom_call.1} parent=0
    _
  %s8 = ssub.s32 1, %s6
  %s9 = scalar_select 0, %s8, %s6
  $region1: #{tpu_custom_call.1} parent=0
    #allocation2 [shape = 'u8[4096]{0}', space=vmem, size = 0x1000, scoped, tag = 'input window, operand 0, single buffered']
    #allocation3 [shape = 's32[1]{0}', space=sflag, size = 0x4, scoped, tag = 'scoped memory for tpu_custom_call.1']
    #allocation4 [shape = 's32[1]{0}', space=sflag, size = 0x4, scoped, tag = 'scoped memory for tpu_custom_call.1']
    #allocation5 [shape = 'u8[4096]{0}', space=vmem, size = 0x1000, scoped, tag = 'input window, operand 1, single buffered']
    #allocation6 [shape = 's32[1]{0}', space=sflag, size = 0x4, scoped, tag = 'scoped memory for tpu_custom_call.1']
    #allocation7 [shape = 'u8[32768]{0}', space=vmem, size = 0x8000, scoped, tag = 'input window, operand 3, single buffered']
    #allocation8 [shape = 'u8[4096]{0}', space=vmem, size = 0x1000, scoped, tag = 'output window, operand 0, single buffered']
    %10 = vsyncpa [#allocation3], 0
    %11 = vsyncpa [#allocation6], 0
    %12 = vsyncpa [#allocation4], 0
    // Predicated region
    $region2: #{tpu_custom_call.1} parent=1 // pred_check
      _
    $region3: #{tpu_custom_call.1} parent=1 // pred_check_branch
      %14 = sbr.rel (0) target = $region5
    $region4: #{tpu_custom_call.1} parent=1 // pred_region
      %16 = vsyncadd [#allocation3], 0
      %s17 = sshll.u32 %s0, 4
      %s18 = int_to_ptr.hbm [resolvable:$true] %s17
      %s19 = sshll.u32 [#allocation2], 4
      %s20 = int_to_ptr.vmem [resolvable:$true] %s19
      %25 = dma.hbm_to_vmem [thread:$0]  %s18, 128, %s20, [#allocation3], 64, 64, 4
    $region5: #{tpu_custom_call.1} parent=1 // pred_fallthru
      _
    // Predicated region
    $region6: #{tpu_custom_call.1} parent=1 // pred_check
      _
    $region7: #{tpu_custom_call.1} parent=1 // pred_check_branch
      %27 = sbr.rel (0) target = $region9
    $region8: #{tpu_custom_call.1} parent=1 // pred_region
      %29 = vsyncadd [#allocation6], 0
      %s30 = sshll.u32 %s1, 4
      %s31 = int_to_ptr.hbm [resolvable:$true] %s30
      %s32 = sshll.u32 [#allocation5], 4
      %s33 = int_to_ptr.vmem [resolvable:$true] %s32
      %38 = dma.hbm_to_vmem [thread:$0]  %s31, 128, %s33, [#allocation6], 64, 64, 4
    $region9: #{tpu_custom_call.1} parent=1 // pred_fallthru
      _
    // Predicated region
    $region10: #{tpu_custom_call.1} parent=1 // pred_check
      _
    $region11: #{tpu_custom_call.1} parent=1 // pred_check_branch
      %40 = sbr.rel (0) target = $region13
    $region12: #{tpu_custom_call.1} parent=1 // pred_region
      _
    $region13: #{tpu_custom_call.1} parent=1 // pred_fallthru
      _
    // Predicated region
    $region14: #{tpu_custom_call.1} parent=1 // pred_check
      _
    $region15: #{tpu_custom_call.1} parent=1 // pred_check_branch
      %42 = sbr.rel (0) target = $region17
    $region16: #{tpu_custom_call.1} parent=1 // pred_region
      %44 = vsyncadd [#allocation6], 0
      %s45 = sshll.u32 %s3, 4
      %s46 = int_to_ptr.hbm [resolvable:$true] %s45
      %s47 = sshll.u32 [#allocation7], 4
      %s48 = int_to_ptr.vmem [resolvable:$true] %s47
      %53 = dma.hbm_to_vmem [thread:$0]  %s46, 1024, %s48, [#allocation6], 64, 64, 4
    $region17: #{tpu_custom_call.1} parent=1 // pred_fallthru
      _
    // Predicated region
    $region18: #{tpu_custom_call.1} parent=1 // pred_check
      _
    $region19: #{tpu_custom_call.1} parent=1 // pred_check_branch
      %55 = sbr.rel (0) target = $region21
    $region20: #{tpu_custom_call.1} parent=1 // pred_region
      _
    $region21: #{tpu_custom_call.1} parent=1 // pred_fallthru
      _
    // Predicated region
    $region22: #{tpu_custom_call.1} parent=1 // pred_check
      _
    $region23: #{tpu_custom_call.1} parent=1 // pred_check_branch
      %57 = sbr.rel (0) target = $region25
    $region24: #{tpu_custom_call.1} parent=1 // pred_region
      %59 = dma.done [#allocation3], 128
    $region25: #{tpu_custom_call.1} parent=1 // pred_fallthru
      _
    // Predicated region
    $region26: #{tpu_custom_call.1} parent=1 // pred_check
      _
    $region27: #{tpu_custom_call.1} parent=1 // pred_check_branch
      %61 = sbr.rel (0) target = $region29
    $region28: #{tpu_custom_call.1} parent=1 // pred_region
      %63 = dma.done [#allocation6], 128
    $region29: #{tpu_custom_call.1} parent=1 // pred_fallthru
      _
    // Predicated region
    $region30: #{tpu_custom_call.1} parent=1 // pred_check
      _
    $region31: #{tpu_custom_call.1} parent=1 // pred_check_branch
      %65 = sbr.rel (0) target = $region33
    $region32: #{tpu_custom_call.1} parent=1 // pred_region
      %67 = dma.done [#allocation6], 1024
    $region33: #{tpu_custom_call.1} parent=1 // pred_fallthru
      _
    %v69 = vld [vmem:[#allocation2] sm:$0xf]
    %v70 = vld [vmem:[#allocation2 + $0x4] sm:$0x3]
    %v71 = vld [vmem:[#allocation5] sm:$0xf]
    %v72 = vld [vmem:[#allocation5 + $0x4] sm:$0xf]
    %v73 = vld [vmem:[%s2] sm:$0x1]
    %v75 = vperm.slane %v73, 0
    %v79 = vunpack.c.l.b16 %v69
    %v80 = vunpack.c.l.b16 %v70
    %v81 = vpack.c.b16 %v80, %v79
    %v84 = vunpack.c.l.b16 %v71
    %v85 = vunpack.c.l.b16 %v72
    %v86 = vpack.c.b16 %v85, %v84
    %vm88 = vcmask 130048
    %v90 = vsel %vm88, %v81, 0
    %92 = vmatpush.bf16.msra.mxu0 0
    %93 = vmatpush.bf16.msra.mxu0 0
    %94 = vmatpush.bf16.msra.mxu0 0
    %95 = vmatpush.bf16.msra.mxu0 0
    %96 = vmatpush.bf16.msra.mxu0 0
    %97 = vmatpush.bf16.msra.mxu0 0
    %98 = vmatpush.bf16.msra.mxu0 0
    %99 = vmatpush.bf16.msra.mxu0 %v86
    %100 = vmatmul.bf16.gmra.mxu0 %v90
    %v101 = vpop.f32.mrf.mxu0
    %v102 = vadd.f32 %v75, %v101
    %v103 = vpop.f32.mrf.mxu0
    %v104 = vadd.f32 %v75, %v103
    %105 = vdwg.mxu0
    %v106 = vmax.f32 %v102, 0.0
    %v107 = vmax.f32 %v104, 0.0
    %v108 = vpack.c.bf16 %v107, %v106
    %v109 = vld [vmem:[#allocation7] sm:$0xf]
    %v110 = vld [vmem:[#allocation7 + $0x4] sm:$0xf]
    %v111 = vld [vmem:[#allocation7 + $0x8] sm:$0xf]
    %v112 = vld [vmem:[#allocation7 + $0xc] sm:$0xf]
    %v113 = vld [vmem:[#allocation7 + $0x10] sm:$0xf]
    %v114 = vld [vmem:[#allocation7 + $0x14] sm:$0xf]
    %v115 = vld [vmem:[#allocation7 + $0x18] sm:$0xf]
    %v116 = vld [vmem:[#allocation7 + $0x1c] sm:$0xf]
    %v117 = vld [vmem:[#allocation7 + $0x20] sm:$0xf]
    %v118 = vld [vmem:[#allocation7 + $0x24] sm:$0xf]
    %v119 = vld [vmem:[#allocation7 + $0x28] sm:$0xf]
    %v120 = vld [vmem:[#allocation7 + $0x2c] sm:$0xf]
    %v121 = vld [vmem:[#allocation7 + $0x30] sm:$0xf]
    %v122 = vld [vmem:[#allocation7 + $0x34] sm:$0xf]
    %v123 = vld [vmem:[#allocation7 + $0x38] sm:$0xf]
    %v124 = vld [vmem:[#allocation7 + $0x3c] sm:$0xf]
    %v125 = vld [vmem:[%s4] sm:$0x1]
    %v127 = vperm.slane %v125, 0
    %v145 = vunpack.c.l.b16 %v109
    %v146 = vunpack.c.l.b16 %v110
    %v147 = vunpack.c.l.b16 %v111
    %v148 = vunpack.c.l.b16 %v112
    %v149 = vunpack.c.l.b16 %v113
    %v150 = vunpack.c.l.b16 %v114
    %v151 = vunpack.c.l.b16 %v115
    %v152 = vunpack.c.l.b16 %v116
    %v153 = vunpack.c.l.b16 %v117
    %v154 = vunpack.c.l.b16 %v118
    %v155 = vunpack.c.l.b16 %v119
    %v156 = vunpack.c.l.b16 %v120
    %v157 = vunpack.c.l.b16 %v121
    %v158 = vunpack.c.l.b16 %v122
    %v159 = vunpack.c.l.b16 %v123
    %v160 = vunpack.c.l.b16 %v124
    %v161 = vpack.c.b16 %v146, %v145
    %v162 = vpack.c.b16 %v148, %v147
    %v163 = vpack.c.b16 %v150, %v149
    %v164 = vpack.c.b16 %v152, %v151
    %v165 = vpack.c.b16 %v154, %v153
    %v166 = vpack.c.b16 %v156, %v155
    %v167 = vpack.c.b16 %v158, %v157
    %v168 = vpack.c.b16 %v160, %v159
    %177 = vmatpush.bf16.msra.mxu0 %v168
    %178 = vmatpush.bf16.msra.mxu0 %v167
    %179 = vmatpush.bf16.msra.mxu0 %v166
    %180 = vmatpush.bf16.msra.mxu0 %v165
    %181 = vmatpush.bf16.msra.mxu0 %v164
    %182 = vmatpush.bf16.msra.mxu0 %v163
    %183 = vmatpush.bf16.msra.mxu0 %v162
    %184 = vmatpush.bf16.msra.mxu0 %v161
    %185 = vmatmul.bf16.gmra.mxu0 %v108
    %v186 = vpop.f32.mrf.mxu0
    %v187 = vadd.f32 %v127, %v186
    %v188 = vpop.f32.mrf.mxu0
    %v189 = vadd.f32 %v127, %v188
    %190 = vdwg.mxu0
    %v191 = vmax.f32 %v187, 0.0
    %v192 = vmax.f32 %v189, 0.0
    %v193 = vpack.c.bf16 %v191, %v191
    %v194 = vpack.c.bf16 %v192, %v192
    %195 = vst [vmem:[#allocation8] sm:$0xf] %v193
    %196 = vst [vmem:[#allocation8 + $0x4] sm:$0x3] %v194
    // Predicated region
    $region34: #{tpu_custom_call.1} parent=1 // pred_check
      _
    $region35: #{tpu_custom_call.1} parent=1 // pred_check_branch
      %198 = sbr.rel (0) target = $region37
    $region36: #{tpu_custom_call.1} parent=1 // pred_region
      %200 = vsyncadd [#allocation4], 0
      %s201 = sshll.u32 [#allocation8], 4
      %s202 = int_to_ptr.vmem [resolvable:$true] %s201
      %s203 = sshll.u32 %s5, 4
      %s204 = int_to_ptr.hbm [resolvable:$true] %s203
      %209 = dma.vmem_to_hbm [thread:$0]  %s202, 128, %s204, [#allocation4], 64, 64, 4
    $region37: #{tpu_custom_call.1} parent=1 // pred_fallthru
      _
    // Predicated region
    $region38: #{tpu_custom_call.1} parent=1 // pred_check
      _
    $region39: #{tpu_custom_call.1} parent=1 // pred_check_branch
      %211 = sbr.rel (0) target = $region41
    $region40: #{tpu_custom_call.1} parent=1 // pred_region
      %213 = dma.done [#allocation4], 128
    $region41: #{tpu_custom_call.1} parent=1 // pred_fallthru
      _
    %214 = vsyncpa [#allocation3], 1
    %215 = vsyncpa [#allocation6], 1
    %216 = vsyncpa [#allocation4], 1

// kernel: tpu_custom_call.1
$region0: #{tpu_custom_call.1}
  #allocation0 [shape = 'u32[]', space=smem, size = 0x4, offset = 0x4, fixed_abs, tag = 'smem constant byte address 0x4 - core index']
  #allocation1 [shape = 'u32[72,128]{1,0:T(1,128)}', space=vmem, size = 0x9000, scoped, tag = 'internal scratch']
  %s0 = inlined_call_operand.hbm [shape: bf16[12,16], index: 0, kind: input, shape index: {}]
  %s1 = inlined_call_operand.hbm [shape: bf16[16,128], index: 1, kind: input, shape index: {}]
  %s2 = inlined_call_operand.vmem [shape: f32[1,128], index: 2, kind: input, shape index: {}]
  %s3 = inlined_call_operand.hbm [shape: bf16[128,128], index: 3, kind: input, shape index: {}]
  %s4 = inlined_call_operand.vmem [shape: f32[1,128], index: 4, kind: input, shape index: {}]
  %s5 = inlined_call_operand.hbm [shape: bf16[12,128], index: 5, kind: output, shape index: {}]
  %s6 = sld [smem:[#allocation0]]
  $region42: #{tpu_custom_call.1} parent=0
    _
  %s8 = ssub.s32 1, %s6
  %s9 = scalar_select 0, %s8, %s6
  $region1: #{tpu_custom_call.1} parent=0
    #allocation2 [shape = 'u8[4096]{0}', space=vmem, size = 0x1000, scoped, tag = 'input window, operand 0, single buffered']
    #allocation3 [shape = 's32[1]{0}', space=sflag, size = 0x4, scoped, tag = 'scoped memory for tpu_custom_call.1']
    #allocation4 [shape = 's32[1]{0}', space=sflag, size = 0x4, scoped, tag = 'scoped memory for tpu_custom_call.1']
    #allocation5 [shape = 'u8[4096]{0}', space=vmem, size = 0x1000, scoped, tag = 'input window, operand 1, single buffered']
    #allocation6 [shape = 's32[1]{0}', space=sflag, size = 0x4, scoped, tag = 'scoped memory for tpu_custom_call.1']
    #allocation7 [shape = 'u8[32768]{0}', space=vmem, size = 0x8000, scoped, tag = 'input window, operand 3, single buffered']
    #allocation8 [shape = 'u8[4096]{0}', space=vmem, size = 0x1000, scoped, tag = 'output window, operand 0, single buffered']
    %10 = vsyncpa [#allocation3], 0
    %11 = vsyncpa [#allocation6], 0
    %12 = vsyncpa [#allocation4], 0
    // Predicated region
    $region2: #{tpu_custom_call.1} parent=1 // pred_check
      _
    $region3: #{tpu_custom_call.1} parent=1 // pred_check_branch
      %14 = sbr.rel (0) target = $region5
    $region4: #{tpu_custom_call.1} parent=1 // pred_region
      %16 = vsyncadd [#allocation3], 0
      %s17 = sshll.u32 %s0, 4
      %s18 = int_to_ptr.hbm [resolvable:$true] %s17
      %s19 = sshll.u32 [#allocation2], 4
      %s20 = int_to_ptr.vmem [resolvable:$true] %s19
      %25 = dma.hbm_to_vmem [thread:$0]  %s18, 128, %s20, [#allocation3], 64, 64, 4
    $region5: #{tpu_custom_call.1} parent=1 // pred_fallthru
      _
    // Predicated region
    $region6: #{tpu_custom_call.1} parent=1 // pred_check
      _
    $region7: #{tpu_custom_call.1} parent=1 // pred_check_branch
      %27 = sbr.rel (0) target = $region9
    $region8: #{tpu_custom_call.1} parent=1 // pred_region
      %29 = vsyncadd [#allocation6], 0
      %s30 = sshll.u32 %s1, 4
      %s31 = int_to_ptr.hbm [resolvable:$true] %s30
      %s32 = sshll.u32 [#allocation5], 4
      %s33 = int_to_ptr.vmem [resolvable:$true] %s32
      %38 = dma.hbm_to_vmem [thread:$0]  %s31, 128, %s33, [#allocation6], 64, 64, 4
    $region9: #{tpu_custom_call.1} parent=1 // pred_fallthru
      _
    // Predicated region
    $region10: #{tpu_custom_call.1} parent=1 // pred_check
      _
    $region11: #{tpu_custom_call.1} parent=1 // pred_check_branch
      %40 = sbr.rel (0) target = $region13
    $region12: #{tpu_custom_call.1} parent=1 // pred_region
      _
    $region13: #{tpu_custom_call.1} parent=1 // pred_fallthru
      _
    // Predicated region
    $region14: #{tpu_custom_call.1} parent=1 // pred_check
      _
    $region15: #{tpu_custom_call.1} parent=1 // pred_check_branch
      %42 = sbr.rel (0) target = $region17
    $region16: #{tpu_custom_call.1} parent=1 // pred_region
      %44 = vsyncadd [#allocation6], 0
      %s45 = sshll.u32 %s3, 4
      %s46 = int_to_ptr.hbm [resolvable:$true] %s45
      %s47 = sshll.u32 [#allocation7], 4
      %s48 = int_to_ptr.vmem [resolvable:$true] %s47
      %53 = dma.hbm_to_vmem [thread:$0]  %s46, 1024, %s48, [#allocation6], 64, 64, 4
    $region17: #{tpu_custom_call.1} parent=1 // pred_fallthru
      _
    // Predicated region
    $region18: #{tpu_custom_call.1} parent=1 // pred_check
      _
    $region19: #{tpu_custom_call.1} parent=1 // pred_check_branch
      %55 = sbr.rel (0) target = $region21
    $region20: #{tpu_custom_call.1} parent=1 // pred_region
      _
    $region21: #{tpu_custom_call.1} parent=1 // pred_fallthru
      _
    // Predicated region
    $region22: #{tpu_custom_call.1} parent=1 // pred_check
      _
    $region23: #{tpu_custom_call.1} parent=1 // pred_check_branch
      %57 = sbr.rel (0) target = $region25
    $region24: #{tpu_custom_call.1} parent=1 // pred_region
      %59 = dma.done [#allocation3], 128
    $region25: #{tpu_custom_call.1} parent=1 // pred_fallthru
      _
    // Predicated region
    $region26: #{tpu_custom_call.1} parent=1 // pred_check
      _
    $region27: #{tpu_custom_call.1} parent=1 // pred_check_branch
      %61 = sbr.rel (0) target = $region29
    $region28: #{tpu_custom_call.1} parent=1 // pred_region
      %63 = dma.done [#allocation6], 128
    $region29: #{tpu_custom_call.1} parent=1 // pred_fallthru
      _
    // Predicated region
    $region30: #{tpu_custom_call.1} parent=1 // pred_check
      _
    $region31: #{tpu_custom_call.1} parent=1 // pred_check_branch
      %65 = sbr.rel (0) target = $region33
    $region32: #{tpu_custom_call.1} parent=1 // pred_region
      %67 = dma.done [#allocation6], 1024
    $region33: #{tpu_custom_call.1} parent=1 // pred_fallthru
      _
    %v69 = vld [vmem:[#allocation2] sm:$0xf]
    %v70 = vld [vmem:[#allocation2 + $0x4] sm:$0x3]
    %v71 = vld [vmem:[#allocation5] sm:$0xf]
    %v72 = vld [vmem:[#allocation5 + $0x4] sm:$0xf]
    %v73 = vld [vmem:[%s2] sm:$0x1]
    %v75 = vperm.slane %v73, 0
    %v79 = vunpack.c.l.b16 %v69
    %v80 = vunpack.c.l.b16 %v70
    %v81 = vpack.c.b16 %v80, %v79
    %v84 = vunpack.c.l.b16 %v71
    %v85 = vunpack.c.l.b16 %v72
    %v86 = vpack.c.b16 %v85, %v84
    %vm88 = vcmask 130048
    %v90 = vsel %vm88, %v81, 0
    %92 = vmatpush.bf16.msra.mxu0 0
    %93 = vmatpush.bf16.msra.mxu0 0
    %94 = vmatpush.bf16.msra.mxu0 0
    %95 = vmatpush.bf16.msra.mxu0 0
    %96 = vmatpush.bf16.msra.mxu0 0
    %97 = vmatpush.bf16.msra.mxu0 0
    %98 = vmatpush.bf16.msra.mxu0 0
    %99 = vmatpush.bf16.msra.mxu0 %v86
    %100 = vmatmul.bf16.gmra.mxu0 %v90
    %v101 = vpop.f32.mrf.mxu0
    %v102 = vadd.f32 %v75, %v101
    %v103 = vpop.f32.mrf.mxu0
    %v104 = vadd.f32 %v75, %v103
    %105 = vdwg.mxu0
    %v106 = vmax.f32 %v102, 0.0
    %v107 = vmax.f32 %v104, 0.0
    %v108 = vpack.c.bf16 %v107, %v106
    %v109 = vld [vmem:[#allocation7] sm:$0xf]
    %v110 = vld [vmem:[#allocation7 + $0x4] sm:$0xf]
    %v111 = vld [vmem:[#allocation7 + $0x8] sm:$0xf]
    %v112 = vld [vmem:[#allocation7 + $0xc] sm:$0xf]
    %v113 = vld [vmem:[#allocation7 + $0x10] sm:$0xf]
    %v114 = vld [vmem:[#allocation7 + $0x14] sm:$0xf]
    %v115 = vld [vmem:[#allocation7 + $0x18] sm:$0xf]
    %v116 = vld [vmem:[#allocation7 + $0x1c] sm:$0xf]
    %v117 = vld [vmem:[#allocation7 + $0x20] sm:$0xf]
    %v118 = vld [vmem:[#allocation7 + $0x24] sm:$0xf]
    %v119 = vld [vmem:[#allocation7 + $0x28] sm:$0xf]
    %v120 = vld [vmem:[#allocation7 + $0x2c] sm:$0xf]
    %v121 = vld [vmem:[#allocation7 + $0x30] sm:$0xf]
    %v122 = vld [vmem:[#allocation7 + $0x34] sm:$0xf]
    %v123 = vld [vmem:[#allocation7 + $0x38] sm:$0xf]
    %v124 = vld [vmem:[#allocation7 + $0x3c] sm:$0xf]
    %v125 = vld [vmem:[%s4] sm:$0x1]
    %v127 = vperm.slane %v125, 0
    %v145 = vunpack.c.l.b16 %v109
    %v146 = vunpack.c.l.b16 %v110
    %v147 = vunpack.c.l.b16 %v111
    %v148 = vunpack.c.l.b16 %v112
    %v149 = vunpack.c.l.b16 %v113
    %v150 = vunpack.c.l.b16 %v114
    %v151 = vunpack.c.l.b16 %v115
    %v152 = vunpack.c.l.b16 %v116
    %v153 = vunpack.c.l.b16 %v117
    %v154 = vunpack.c.l.b16 %v118
    %v155 = vunpack.c.l.b16 %v119
    %v156 = vunpack.c.l.b16 %v120
    %v157 = vunpack.c.l.b16 %v121
    %v158 = vunpack.c.l.b16 %v122
    %v159 = vunpack.c.l.b16 %v123
    %v160 = vunpack.c.l.b16 %v124
    %v161 = vpack.c.b16 %v146, %v145
    %v162 = vpack.c.b16 %v148, %v147
    %v163 = vpack.c.b16 %v150, %v149
    %v164 = vpack.c.b16 %v152, %v151
    %v165 = vpack.c.b16 %v154, %v153
    %v166 = vpack.c.b16 %v156, %v155
    %v167 = vpack.c.b16 %v158, %v157
    %v168 = vpack.c.b16 %v160, %v159
    %177 = vmatpush.bf16.msra.mxu0 %v168
    %178 = vmatpush.bf16.msra.mxu0 %v167
    %179 = vmatpush.bf16.msra.mxu0 %v166
    %180 = vmatpush.bf16.msra.mxu0 %v165
    %181 = vmatpush.bf16.msra.mxu0 %v164
    %182 = vmatpush.bf16.msra.mxu0 %v163
    %183 = vmatpush.bf16.msra.mxu0 %v162
    %184 = vmatpush.bf16.msra.mxu0 %v161
    %185 = vmatmul.bf16.gmra.mxu0 %v108
    %v186 = vpop.f32.mrf.mxu0
    %v187 = vadd.f32 %v127, %v186
    %v188 = vpop.f32.mrf.mxu0
    %v189 = vadd.f32 %v127, %v188
    %190 = vdwg.mxu0
    %v191 = vmax.f32 %v187, 0.0
    %v192 = vmax.f32 %v189, 0.0
    %v193 = vpack.c.bf16 %v191, %v191
    %v194 = vpack.c.bf16 %v192, %v192
    %195 = vst [vmem:[#allocation8] sm:$0xf] %v193
    %196 = vst [vmem:[#allocation8 + $0x4] sm:$0x3] %v194
    // Predicated region
    $region34: #{tpu_custom_call.1} parent=1 // pred_check
      _
    $region35: #{tpu_custom_call.1} parent=1 // pred_check_branch
      %198 = sbr.rel (0) target = $region37
    $region36: #{tpu_custom_call.1} parent=1 // pred_region
      %200 = vsyncadd [#allocation4], 0
      %s201 = sshll.u32 [#allocation8], 4
      %s202 = int_to_ptr.vmem [resolvable:$true] %s201
      %s203 = sshll.u32 %s5, 4
      %s204 = int_to_ptr.hbm [resolvable:$true] %s203
      %209 = dma.vmem_to_hbm [thread:$0]  %s202, 128, %s204, [#allocation4], 64, 64, 4
    $region37: #{tpu_custom_call.1} parent=1 // pred_fallthru
      _
    // Predicated region
    $region38: #{tpu_custom_call.1} parent=1 // pred_check
      _
    $region39: #{tpu_custom_call.1} parent=1 // pred_check_branch
      %211 = sbr.rel (0) target = $region41
    $region40: #{tpu_custom_call.1} parent=1 // pred_region
      %213 = dma.done [#allocation4], 128
    $region41: #{tpu_custom_call.1} parent=1 // pred_fallthru
      _
    %214 = vsyncpa [#allocation3], 1
    %215 = vsyncpa [#allocation6], 1
    %216 = vsyncpa [#allocation4], 1

</llo_original>
